<compile_context>
chip_gen: v6e
topology: v6e:2x2x1
jax: 0.10.0
libtpu: 0.0.40
codegen_flags: <defaults>
</compile_context>

<pallas_src>
import jax
import jax.numpy as jnp
import numpy as np
from jax.experimental import pallas as pl
from jax.experimental.pallas import tpu as pltpu


def _round_up(x, m):
    return ((x + m - 1) // m) * m


# ---------------------------------------------------------------------------
# Pallas kernel: ks shifted tap windows (static slices of the L-tile + halo)
#                -> single K = ks*Cin_p MXU matmul -> folded BN -> LeakyReLU.
# ---------------------------------------------------------------------------
def _make_kernel(ks, stride, negative_slope):
    def kernel(x_ref, xh_ref, w_ref, scale_ref, bias_ref, o_ref):
        # x_ref    : (1, stride, Cin_p, TL)   main input window of this L tile
        # xh_ref   : (1, stride, Cin_p, 128)  right halo (next 128 lanes)
        # w_ref    : (tco, ks*Cin_p)          tap-major flattened weights
        # scale_ref: (tco, 1) f32             folded BN scale
        # bias_ref : (tco, 1) f32             folded conv-bias + BN bias
        # o_ref    : (1, tco, TL)             lane-dense NCL output tile
        tl = o_ref.shape[2]
        windows = {}                        # per-phase (Cin_p, TL+128) window
        taps = []
        for t in range(ks):                 # static unroll over taps
            q_off, r = t // stride, t % stride
            if q_off == 0:
                taps.append(x_ref[0, r])    # (Cin_p, TL) straight from VMEM
            else:
                if r not in windows:        # 128-aligned lane concat, built once
                    windows[r] = jnp.concatenate(
                        [x_ref[0, r], xh_ref[0, r]], axis=-1)
                taps.append(windows[r][:, q_off:q_off + tl])
        # Fold the taps along the contraction dim: (ks*Cin_p, TL).
        xs = taps[0] if ks == 1 else jnp.concatenate(taps, axis=0)
        # Single MXU matmul, f32 accumulate.
        acc = jnp.dot(w_ref[...], xs, preferred_element_type=jnp.float32)
        y = acc * scale_ref[...] + bias_ref[...]        # folded BN, f32 epilogue
        o_ref[0, :, :] = jnp.where(
            y > 0, y, jnp.float32(negative_slope) * y).astype(o_ref.dtype)

    return kernel


# ---------------------------------------------------------------------------
# Wrapper: zero-pad / stride-factor the input (glue), Pallas for the hot path.
# ---------------------------------------------------------------------------
def conv_bn_relu(x, params, *, stride, ks, compute_dtype=jnp.float32,
                 out_dtype=jnp.float32, negative_slope=0.01):
    """x: (N, C_in, L) -> (N, C_out, L_out)."""
    compute_dtype = jnp.dtype(compute_dtype)
    out_dtype = jnp.dtype(out_dtype)
    w = params["conv_w"]          # (C_out, C_in, ks)
    b = params["conv_b"]          # (C_out,)
    gamma = params["bn_gamma"]    # (C_out,)
    beta = params["bn_beta"]      # (C_out,)
    rmean = params["bn_mean"]     # (C_out,)
    rvar = params["bn_var"]       # (C_out,)
    eps = 1e-5

    N, Cin, L = x.shape
    Cout = w.shape[0]
    pad = (ks - 1) // 2           # matches nn.Conv1d(..., padding=(ks - 1) // 2)
    L_out = (L + 2 * pad - ks) // stride + 1

    # ---- dtype-aware channel grains (8 sublanes for f32, 16 for bf16) ------
    cin_grain = 8 * (4 // compute_dtype.itemsize)
    cout_grain = max(8 * (4 // compute_dtype.itemsize),
                     8 * (4 // out_dtype.itemsize))
    Cin_p = _round_up(Cin, cin_grain)
    Cout_p = _round_up(Cout, cout_grain)
    Kp = ks * Cin_p

    # ---- Cout tile: minimize padding, cap at the MXU row width --------------
    max_tco = 256 if compute_dtype == jnp.bfloat16 else 128
    if Cout_p <= max_tco:
        tco = Cout_p
    else:
        divs = [d for d in range(cout_grain, max_tco + 1, cout_grain)
                if Cout_p % d == 0]
        tco = max(divs)
        if tco < 32:                 # tiny tiles waste MXU rows -> pad instead
            Cout_p = _round_up(Cout_p, max_tco)
            tco = max_tco

    # ---- generation-aware L tile / VMEM budget -------------------------------
    try:
        vmem_cap = int(pltpu.get_tpu_info().vmem_capacity_bytes)
    except Exception:                # conservative (v7x-sized) fallback
        vmem_cap = 64 * 1024 * 1024
    isz = compute_dtype.itemsize
    osz = out_dtype.itemsize

    def _tile_bytes(tl):
        blocks = (stride * Cin_p * (tl + 128) * isz   # x main + halo blocks
                  + tco * Kp * isz                    # weight block
                  + 2 * tco * 4                       # scale / bias
                  + tco * tl * osz)                   # output block
        temps = (Kp * tl * isz                        # folded-tap operand
                 + tco * tl * 4                       # f32 accumulator/epilogue
                 + stride * Cin_p * (tl + 128) * isz)  # concat windows
        return 2 * blocks + temps                     # x2: double buffering

    L128 = _round_up(L_out, 128)
    budget = int(0.45 * vmem_cap)
    TL = 128
    for cand in (2048, 1024, 512, 256, 128):
        c = min(cand, L128)
        if _tile_bytes(c) <= budget:
            TL = c
            break
    Lp = _round_up(L128, TL)          # lane-dense, multiple of the L tile
    Qp = Lp + 128                     # main tiles + one 128-lane halo block
    Lx = Qp * stride
    assert Lx >= L + 2 * pad, "padded input shorter than conv receptive field"

    # ---- glue: zero-pad + stride-factor the input (no ks-times im2col) -----
    # TODO(synk): for very long L the padded x copy could be avoided entirely by
    # doing the zero-pad in-kernel with masked edge tiles.
    x_ext = jnp.pad(x, ((0, 0), (0, Cin_p - Cin), (pad, Lx - L - pad)))
    if stride == 1:
        x_q = x_ext[:, None]                                    # pure reshape
    else:
        # x_q[n, r, ci, q] == x_padded[n, ci, q*stride + r]
        x_q = x_ext.reshape(N, Cin_p, Qp, stride).transpose(0, 3, 1, 2)
    x_q = x_q.astype(compute_dtype)                 # (N, stride, Cin_p, Qp)

    # ---- weights: tap-major flatten to (Cout_p, ks*Cin_p) -------------------
    w_p = jnp.pad(w, ((0, Cout_p - Cout), (0, Cin_p - Cin), (0, 0)))
    w_flat = jnp.transpose(w_p, (0, 2, 1)).reshape(Cout_p, Kp).astype(compute_dtype)

    # ---- fold conv bias + BN (eval mode) into per-channel scale/bias -------
    scale = gamma / jnp.sqrt(rvar + eps)
    bias = beta + (b - rmean) * scale
    scale_p = jnp.pad(scale, (0, Cout_p - Cout)).reshape(Cout_p, 1).astype(jnp.float32)
    bias_p = jnp.pad(bias, (0, Cout_p - Cout)).reshape(Cout_p, 1).astype(jnp.float32)

    # ---- pallas_call ---------------------------------------------------------
    n_j = Cout_p // tco
    n_l = Lp // TL
    grid = (N, n_j, n_l)
    lanes_per_tile = TL // 128
    vmem_limit = int(min(max(3 * _tile_bytes(TL), 32 * 1024 * 1024),
                         int(0.8 * vmem_cap)))
    cost = pl.CostEstimate(
        flops=2 * N * Cout * Cin * ks * L_out,
        transcendentals=0,
        bytes_accessed=int(n_j * x_q.size * isz + w_flat.size * isz
                           + (scale_p.size + bias_p.size) * 4
                           + N * Cout_p * Lp * osz),
    )

    out = pl.pallas_call(
        _make_kernel(ks, stride, negative_slope),
        out_shape=jax.ShapeDtypeStruct((N, Cout_p, Lp), out_dtype),
        grid_spec=pltpu.PrefetchScalarGridSpec(
            num_scalar_prefetch=0,
            grid=grid,
            in_specs=[
                # main input window of this L tile
                pl.BlockSpec((1, stride, Cin_p, TL),
                             lambda n, j, l: (n, 0, 0, l)),
                # 128-lane right halo for the shifted taps (same array, 2nd view)
                pl.BlockSpec((1, stride, Cin_p, 128),
                             lambda n, j, l: (n, 0, 0, (l + 1) * lanes_per_tile)),
                # weights / scale / bias: only re-DMA'd when the Cout tile changes
                pl.BlockSpec((tco, Kp), lambda n, j, l: (j, 0)),
                pl.BlockSpec((tco, 1), lambda n, j, l: (j, 0)),
                pl.BlockSpec((tco, 1), lambda n, j, l: (j, 0)),
            ],
            out_specs=pl.BlockSpec((1, tco, TL), lambda n, j, l: (n, j, l)),
        ),
        compiler_params=pltpu.CompilerParams(
            dimension_semantics=("parallel", "parallel", "parallel"),
            vmem_limit_bytes=vmem_limit,
        ),
        cost_estimate=cost,
    )(x_q, x_q, w_flat, scale_p, bias_p)

    # Padded channels / spatial positions are sliced off; output is already NCL.
    return out[:, :Cout, :L_out]


# ---------------------------------------------------------------------------
# Pure-JAX reference (same semantics) for correctness checks.
# ---------------------------------------------------------------------------
def conv_bn_relu_ref(x, params, *, stride, ks, negative_slope=0.01):
    w, b = params["conv_w"], params["conv_b"]
    gamma, beta = params["bn_gamma"], params["bn_beta"]
    rmean, rvar = params["bn_mean"], params["bn_var"]
    eps = 1e-5
    pad = (ks - 1) // 2
    y = jax.lax.conv_general_dilated(
        x, w, window_strides=(stride,), padding=[(pad, pad)],
        dimension_numbers=("NCH", "OIH", "NCH"))
    y = y + b[None, :, None]
    y = (y - rmean[None, :, None]) / jnp.sqrt(rvar[None, :, None] + eps)
    y = y * gamma[None, :, None] + beta[None, :, None]
    return jnp.where(y > 0, y, negative_slope * y)


if __name__ == "__main__":
    # ConvBNReLU(nin=4, nout=8, stride=1, ks=3) on x of shape (2, 4, 16)
    nin, nout, ks = 4, 8, 3
    N, L = 2, 16

    key = jax.random.PRNGKey(0)
    kx, kw, kb, kg, kbe, km, kv = jax.random.split(key, 7)

    x = jax.random.normal(kx, (N, nin, L), dtype=jnp.float32)
    params = {
        "conv_w": jax.random.normal(kw, (nout, nin, ks), dtype=jnp.float32) * 0.2,
        "conv_b": jax.random.normal(kb, (nout,), dtype=jnp.float32) * 0.1,
        "bn_gamma": 1.0 + 0.1 * jax.random.normal(kg, (nout,), dtype=jnp.float32),
        "bn_beta": 0.1 * jax.random.normal(kbe, (nout,), dtype=jnp.float32),
        "bn_mean": 0.05 * jax.random.normal(km, (nout,), dtype=jnp.float32),
        "bn_var": 1.0 + 0.1 * jnp.abs(jax.random.normal(kv, (nout,), dtype=jnp.float32)),
    }

    # stride=1, f32 operands: strict check against the XLA conv reference.
    out = jax.block_until_ready(conv_bn_relu(x, params, stride=1, ks=ks))
    ref = jax.block_until_ready(conv_bn_relu_ref(x, params, stride=1, ks=ks))
    np.testing.assert_allclose(np.asarray(out), np.asarray(ref), rtol=1e-4, atol=1e-5)
    assert out.shape == ref.shape == (N, nout, L)

    # stride=2 exercises the stride-factored tap path.
    out_s2 = jax.block_until_ready(conv_bn_relu(x, params, stride=2, ks=ks))
    ref_s2 = conv_bn_relu_ref(x, params, stride=2, ks=ks)
    np.testing.assert_allclose(np.asarray(out_s2), np.asarray(ref_s2),
                               rtol=1e-4, atol=1e-5)
    assert out_s2.shape == ref_s2.shape

    # bf16 MXU operands + bf16 output writeback (v6e/v7x-friendly), f32 epilogue.
    out_bf = jax.block_until_ready(conv_bn_relu(
        x, params, stride=1, ks=ks,
        compute_dtype=jnp.bfloat16, out_dtype=jnp.bfloat16))
    np.testing.assert_allclose(np.asarray(out_bf.astype(jnp.float32)),
                               np.asarray(ref), rtol=5e-2, atol=5e-2)

    print("KERNEL_OK")
</pallas_src>

<mosaic_0001>
module attributes {stable_mosaic.version = 11 : i64} {
  func.func @kernel(%arg0: i32, %arg1: i32, %arg2: i32, %arg3: memref<1x1x8x128xf32, #tpu.memory_space<vmem>>, %arg4: memref<1x1x8x128xf32, #tpu.memory_space<vmem>>, %arg5: memref<8x24xf32, #tpu.memory_space<vmem>>, %arg6: memref<8x1xf32, #tpu.memory_space<vmem>>, %arg7: memref<8x1xf32, #tpu.memory_space<vmem>>, %arg8: memref<1x8x128xf32, #tpu.memory_space<vmem>>) attributes {dimension_semantics = [#tpu.dimension_semantics<parallel>, #tpu.dimension_semantics<parallel>, #tpu.dimension_semantics<parallel>], iteration_bounds = array<i64: 2, 1, 1>, scalar_prefetch = 0 : i64, scratch_operands = 0 : i64, tpu.core_type = #tpu.core_type<tc>, window_params = [{transform_indices = @transform_0, window_bounds = array<i64: 1, 1, 8, 128>}, {transform_indices = @transform_1, window_bounds = array<i64: 1, 1, 8, 128>}, {transform_indices = @transform_2, window_bounds = array<i64: 8, 24>}, {transform_indices = @transform_3, window_bounds = array<i64: 8, 1>}, {transform_indices = @transform_4, window_bounds = array<i64: 8, 1>}, {transform_indices = @transform_5, window_bounds = array<i64: 1, 8, 128>}]} {
    %c0 = arith.constant 0 : index
    %c0_0 = arith.constant 0 : index
    %c0_1 = arith.constant 0 : index
    %c0_2 = arith.constant 0 : index
    %0 = vector.load %arg3[%c0, %c0_0, %c0_1, %c0_2] : memref<1x1x8x128xf32, #tpu.memory_space<vmem>>, vector<1x1x8x128xf32>
    %1 = vector.shape_cast %0 : vector<1x1x8x128xf32> to vector<8x128xf32>
    %c0_3 = arith.constant 0 : index
    %c0_4 = arith.constant 0 : index
    %c0_5 = arith.constant 0 : index
    %c0_6 = arith.constant 0 : index
    %2 = vector.load %arg3[%c0_3, %c0_4, %c0_5, %c0_6] : memref<1x1x8x128xf32, #tpu.memory_space<vmem>>, vector<1x1x8x128xf32>
    %3 = vector.shape_cast %2 : vector<1x1x8x128xf32> to vector<8x128xf32>
    %c0_7 = arith.constant 0 : index
    %c0_8 = arith.constant 0 : index
    %c0_9 = arith.constant 0 : index
    %c0_10 = arith.constant 0 : index
    %4 = vector.load %arg4[%c0_7, %c0_8, %c0_9, %c0_10] : memref<1x1x8x128xf32, #tpu.memory_space<vmem>>, vector<1x1x8x128xf32>
    %5 = vector.shape_cast %4 : vector<1x1x8x128xf32> to vector<8x128xf32>
    %6 = tpu.concatenate %3, %5 in 1 : vector<8x128xf32>, vector<8x128xf32> -> vector<8x256xf32>
    %7 = vector.extract_strided_slice %6 {offsets = [0, 1], sizes = [8, 128], strides = [1, 1]} : vector<8x256xf32> to vector<8x128xf32>
    %8 = vector.extract_strided_slice %6 {offsets = [0, 2], sizes = [8, 128], strides = [1, 1]} : vector<8x256xf32> to vector<8x128xf32>
    %9 = tpu.concatenate %1, %7, %8 in 0 : vector<8x128xf32>, vector<8x128xf32>, vector<8x128xf32> -> vector<24x128xf32>
    %c0_11 = arith.constant 0 : index
    %c0_12 = arith.constant 0 : index
    %10 = vector.load %arg5[%c0_11, %c0_12] : memref<8x24xf32, #tpu.memory_space<vmem>>, vector<8x24xf32>
    %cst = arith.constant dense<0.000000e+00> : vector<8x128xf32>
    %11 = tpu.matmul %10, %9, %cst {dimension_numbers = #tpu.dot_dimension_numbers<[1], [0], [0], [1], [0, 0, 1, 1], [], []>} : vector<8x24xf32>, vector<24x128xf32>, vector<8x128xf32> -> vector<8x128xf32>
    %c0_13 = arith.constant 0 : index
    %c0_14 = arith.constant 0 : index
    %12 = vector.load %arg6[%c0_13, %c0_14] : memref<8x1xf32, #tpu.memory_space<vmem>>, vector<8x1xf32>
    %13 = vector.broadcast %12 : vector<8x1xf32> to vector<8x128xf32>
    %14 = arith.mulf %11, %13 : vector<8x128xf32>
    %c0_15 = arith.constant 0 : index
    %c0_16 = arith.constant 0 : index
    %15 = vector.load %arg7[%c0_15, %c0_16] : memref<8x1xf32, #tpu.memory_space<vmem>>, vector<8x1xf32>
    %16 = vector.broadcast %15 : vector<8x1xf32> to vector<8x128xf32>
    %17 = arith.addf %14, %16 : vector<8x128xf32>
    %cst_17 = arith.constant 0.000000e+00 : f32
    %18 = vector.broadcast %cst_17 : f32 to vector<8x128xf32>
    %19 = arith.cmpf ogt, %17, %18 : vector<8x128xf32>
    %cst_18 = arith.constant 0.00999999977 : f32
    %20 = vector.broadcast %cst_18 : f32 to vector<8x128xf32>
    %21 = arith.mulf %20, %17 : vector<8x128xf32>
    %22 = arith.select %19, %17, %21 : vector<8x128xi1>, vector<8x128xf32>
    %c0_19 = arith.constant 0 : index
    %c0_20 = arith.constant 0 : index
    %c0_21 = arith.constant 0 : index
    %23 = vector.load %arg8[%c0_19, %c0_20, %c0_21] : memref<1x8x128xf32, #tpu.memory_space<vmem>>, vector<1x8x128xf32>
    %24 = vector.shape_cast %23 : vector<1x8x128xf32> to vector<8x128xf32>
    %25 = vector.shape_cast %22 : vector<8x128xf32> to vector<1x8x128xf32>
    tpu.vector_store %arg8[%c0_19, %c0_20, %c0_21], %25 {strides = array<i32>} : memref<1x8x128xf32, #tpu.memory_space<vmem>>, vector<1x8x128xf32>,
    return
  }
  func.func @transform_0(%arg0: i32, %arg1: i32, %arg2: i32) -> (i32, i32, i32, i32) {
    %c0_i32 = arith.constant 0 : i32
    %c0_i32_0 = arith.constant 0 : i32
    %c0_i32_1 = arith.constant 0 : i32
    return %arg0, %c0_i32, %c0_i32_0, %arg2 : i32, i32, i32, i32
  }
  func.func @transform_1(%arg0: i32, %arg1: i32, %arg2: i32) -> (i32, i32, i32, i32) {
    %c1_i32 = arith.constant 1 : i32
    %0 = arith.addi %arg2, %c1_i32 : i32
    %c1_i32_0 = arith.constant 1 : i32
    %1 = arith.muli %0, %c1_i32_0 : i32
    %c0_i32 = arith.constant 0 : i32
    %c0_i32_1 = arith.constant 0 : i32
    %c0_i32_2 = arith.constant 0 : i32
    return %arg0, %c0_i32, %c0_i32_1, %1 : i32, i32, i32, i32
  }
  func.func @transform_2(%arg0: i32, %arg1: i32, %arg2: i32) -> (i32, i32) {
    %c0_i32 = arith.constant 0 : i32
    %c0_i32_0 = arith.constant 0 : i32
    return %arg1, %c0_i32 : i32, i32
  }
  func.func @transform_3(%arg0: i32, %arg1: i32, %arg2: i32) -> (i32, i32) {
    %c0_i32 = arith.constant 0 : i32
    %c0_i32_0 = arith.constant 0 : i32
    return %arg1, %c0_i32 : i32, i32
  }
  func.func @transform_4(%arg0: i32, %arg1: i32, %arg2: i32) -> (i32, i32) {
    %c0_i32 = arith.constant 0 : i32
    %c0_i32_0 = arith.constant 0 : i32
    return %arg1, %c0_i32 : i32, i32
  }
  func.func @transform_5(%arg0: i32, %arg1: i32, %arg2: i32) -> (i32, i32, i32) {
    %c0_i32 = arith.constant 0 : i32
    return %arg0, %arg1, %arg2 : i32, i32, i32
  }
}

</mosaic_0001>

<llo_original>
// kernel: tpu_custom_call.1
$region0: #{tpu_custom_call.1}
  #allocation0 [shape = 'u32[]', space=smem, size = 0x4, offset = 0x4, fixed_abs, tag = 'smem constant byte address 0x4 - core index']
  #allocation1 [shape = 'u32[144,128]{1,0:T(1,128)}', space=vmem, size = 0x12000, scoped, tag = 'internal scratch']
  %s0 = inlined_call_operand.hbm [shape: f32[2,1,8,256], index: 0, kind: input, shape index: {}]
  %s1 = inlined_call_operand.hbm [shape: f32[2,1,8,256], index: 1, kind: input, shape index: {}]
  %s2 = inlined_call_operand.vmem [shape: f32[8,24], index: 2, kind: input, shape index: {}]
  %s3 = inlined_call_operand.vmem [shape: f32[8,1], index: 3, kind: input, shape index: {}]
  %s4 = inlined_call_operand.vmem [shape: f32[8,1], index: 4, kind: input, shape index: {}]
  %s5 = inlined_call_operand.hbm [shape: f32[2,8,128], index: 5, kind: output, shape index: {}]
  %s6 = sld [smem:[#allocation0]]
  $region61: #{tpu_custom_call.1} parent=0
    _
  %s8 = ssub.s32 1, %s6
  %s9 = scalar_select 0, %s8, %s6
  $region1: #{tpu_custom_call.1} parent=0
    #allocation2 [shape = 'u8[8192]{0}', space=vmem, size = 0x2000, scoped, tag = 'input window, operand 0']
    #allocation3 [shape = 's32[2]{0}', space=sflag, size = 0x8, scoped, tag = 'scoped memory for tpu_custom_call.1']
    #allocation4 [shape = 's32[2]{0}', space=sflag, size = 0x8, scoped, tag = 'scoped memory for tpu_custom_call.1']
    #allocation5 [shape = 'u8[8192]{0}', space=vmem, size = 0x2000, scoped, tag = 'input window, operand 1']
    #allocation6 [shape = 's32[2]{0}', space=sflag, size = 0x8, scoped, tag = 'scoped memory for tpu_custom_call.1']
    #allocation7 [shape = 'u8[8192]{0}', space=vmem, size = 0x2000, scoped, tag = 'output window, operand 0']
    %10 = vsyncpa [#allocation3], 0
    %s11 = scalar_lea.sflag [#allocation3], 1
    %12 = vsyncpa %s11, 0
    %13 = vsyncpa [#allocation6], 0
    %s14 = scalar_lea.sflag [#allocation6], 1
    %15 = vsyncpa %s14, 0
    %16 = vsyncpa [#allocation4], 0
    %s17 = scalar_lea.sflag [#allocation4], 1
    %18 = vsyncpa %s17, 0
    loop: start=0, step=1, limit=4
    $region2: #{tpu_custom_call.1} parent=1 // loop_pre_header
      _
    $region3: #{tpu_custom_call.1} parent=1 // loop_header
      %s20 = sphi 0, %s24
      %p21 = scmp.ge.s32.totalorder %s20, 4
      %s27 = sphi 0, %s46
      %s28 = sphi 0, %s42
      %s29 = sphi 0, %s38
      %s30 = sphi 0, %s27
      %s31 = sphi 0, %s28
      %s32 = sphi 0, %s29
      %s33 = sphi 0, %s30
      %s34 = sphi 0, %s31
      %s35 = sphi 0, %s32
      %s51 = sphi 0, %s53
      %s54 = sphi 0, %s51
      %s55 = sphi 0, %s54
      %s71 = sphi 0, %s55
      %s81 = sphi 0, %s83
      %s84 = sphi 0, %s81
      %s85 = sphi 0, %s84
      %s101 = sphi 0, %s85
      %s107 = sphi 0, %s109
      %s110 = sphi 0, %s107
      %s111 = sphi 0, %s110
      %s127 = sphi 0, %s111
      %s133 = sphi 0, %s135
      %s136 = sphi 0, %s133
      %s137 = sphi 0, %s136
      %s153 = sphi 0, %s137
      %s159 = sphi 0, %s161
      %s162 = sphi 0, %s159
      %s163 = sphi 0, %s162
      %s179 = sphi 0, %s163
      %s189 = sphi 0, %s191
      %s192 = sphi 0, %s189
      %s193 = sphi 0, %s192
      %s209 = sphi 0, %s193
    $region4: #{tpu_custom_call.1} parent=1 // loop_header_branch
      %23 = sbr.rel (%p21) target = $region8
    $region5: #{tpu_custom_call.1} parent=1 // loop_body
      %s25 = ssub.s32 %s20, 1
      %s26 = ssub.s32 %s20, 2
      %s36 = sadd.s32 1, %s29
      %p37 = scmp.ge.s32.totalorder %s36, 1
      %s38 = scalar_select %p37, 0, %s36
      %s39 = sadd.s32 1, %s28
      %s40 = scalar_select %p37, %s39, %s28
      %p41 = scmp.ge.s32.totalorder %s40, 1
      %s42 = scalar_select %p41, 0, %s40
      %s43 = sadd.s32 1, %s27
      %s44 = scalar_select %p41, %s43, %s27
      %p45 = scmp.ge.s32.totalorder %s44, 2
      %s46 = scalar_select %p45, 0, %s44
      %s47 = ssub.s32 %s27, %s46
      %s48 = ssub.s32 %s29, %s38
      %s49 = sor.u32 %s47, %s48
      %p50 = scmp.eq.s32.totalorder %s49, 0
      %s52 = sadd.s32 %s51, 1
      %s53 = scalar_select %p50, %s51, %s52
      %p56 = pneg %p50
      %p57 = scmp.eq.s32.totalorder %s20, 1
      %p58 = por %p56, %p57
      %p59 = scmp.ne.s32.totalorder %s51, %s54
      %p60 = scmp.eq.s32.totalorder %s20, 0
      %p61 = por %p59, %p60
      %p62 = scmp.ne.s32.totalorder %s51, %s54
      %p63 = scmp.eq.s32.totalorder %s25, 1
      %p64 = por %p62, %p63
      %p65 = scmp.ne.s32.totalorder %s54, %s55
      %p66 = scmp.eq.s32.totalorder %s25, 0
      %p67 = por %p65, %p66
      %p68 = scmp.ne.s32.totalorder %s54, %s55
      %p69 = scmp.eq.s32.totalorder %s26, 1
      %p70 = por %p68, %p69
      %p72 = scmp.ne.s32.totalorder %s55, %s71
      %p73 = scmp.eq.s32.totalorder %s26, 0
      %p74 = por %p72, %p73
      %s75 = sadd.s32 %s29, 1
      %s76 = sadd.s32 %s38, 1
      %s77 = ssub.s32 %s27, %s46
      %s78 = ssub.s32 %s75, %s76
      %s79 = sor.u32 %s77, %s78
      %p80 = scmp.eq.s32.totalorder %s79, 0
      %s82 = sadd.s32 %s81, 1
      %s83 = scalar_select %p80, %s81, %s82
      %p86 = pneg %p80
      %p87 = scmp.eq.s32.totalorder %s20, 1
      %p88 = por %p86, %p87
      %p89 = scmp.ne.s32.totalorder %s81, %s84
      %p90 = scmp.eq.s32.totalorder %s20, 0
      %p91 = por %p89, %p90
      %p92 = scmp.ne.s32.totalorder %s81, %s84
      %p93 = scmp.eq.s32.totalorder %s25, 1
      %p94 = por %p92, %p93
      %p95 = scmp.ne.s32.totalorder %s84, %s85
      %p96 = scmp.eq.s32.totalorder %s25, 0
      %p97 = por %p95, %p96
      %p98 = scmp.ne.s32.totalorder %s84, %s85
      %p99 = scmp.eq.s32.totalorder %s26, 1
      %p100 = por %p98, %p99
      %p102 = scmp.ne.s32.totalorder %s85, %s101
      %p103 = scmp.eq.s32.totalorder %s26, 0
      %p104 = por %p102, %p103
      %s105 = ssub.s32 %s28, %s42
      %p106 = scmp.eq.s32.totalorder %s105, 0
      %s108 = sadd.s32 %s107, 1
      %s109 = scalar_select %p106, %s107, %s108
      %p112 = pneg %p106
      %p113 = scmp.eq.s32.totalorder %s20, 1
      %p114 = por %p112, %p113
      %p115 = scmp.ne.s32.totalorder %s107, %s110
      %p116 = scmp.eq.s32.totalorder %s20, 0
      %p117 = por %p115, %p116
      %p118 = scmp.ne.s32.totalorder %s107, %s110
      %p119 = scmp.eq.s32.totalorder %s25, 1
      %p120 = por %p118, %p119
      %p121 = scmp.ne.s32.totalorder %s110, %s111
      %p122 = scmp.eq.s32.totalorder %s25, 0
      %p123 = por %p121, %p122
      %p124 = scmp.ne.s32.totalorder %s110, %s111
      %p125 = scmp.eq.s32.totalorder %s26, 1
      %p126 = por %p124, %p125
      %p128 = scmp.ne.s32.totalorder %s111, %s127
      %p129 = scmp.eq.s32.totalorder %s26, 0
      %p130 = por %p128, %p129
      %s131 = ssub.s32 %s28, %s42
      %p132 = scmp.eq.s32.totalorder %s131, 0
      %s134 = sadd.s32 %s133, 1
      %s135 = scalar_select %p132, %s133, %s134
      %p138 = pneg %p132
      %p139 = scmp.eq.s32.totalorder %s20, 1
      %p140 = por %p138, %p139
      %p141 = scmp.ne.s32.totalorder %s133, %s136
      %p142 = scmp.eq.s32.totalorder %s20, 0
      %p143 = por %p141, %p142
      %p144 = scmp.ne.s32.totalorder %s133, %s136
      %p145 = scmp.eq.s32.totalorder %s25, 1
      %p146 = por %p144, %p145
      %p147 = scmp.ne.s32.totalorder %s136, %s137
      %p148 = scmp.eq.s32.totalorder %s25, 0
      %p149 = por %p147, %p148
      %p150 = scmp.ne.s32.totalorder %s136, %s137
      %p151 = scmp.eq.s32.totalorder %s26, 1
      %p152 = por %p150, %p151
      %p154 = scmp.ne.s32.totalorder %s137, %s153
      %p155 = scmp.eq.s32.totalorder %s26, 0
      %p156 = por %p154, %p155
      %s157 = ssub.s32 %s28, %s42
      %p158 = scmp.eq.s32.totalorder %s157, 0
      %s160 = sadd.s32 %s159, 1
      %s161 = scalar_select %p158, %s159, %s160
      %p164 = pneg %p158
      %p165 = scmp.eq.s32.totalorder %s20, 1
      %p166 = por %p164, %p165
      %p167 = scmp.ne.s32.totalorder %s159, %s162
      %p168 = scmp.eq.s32.totalorder %s20, 0
      %p169 = por %p167, %p168
      %p170 = scmp.ne.s32.totalorder %s159, %s162
      %p171 = scmp.eq.s32.totalorder %s25, 1
      %p172 = por %p170, %p171
      %p173 = scmp.ne.s32.totalorder %s162, %s163
      %p174 = scmp.eq.s32.totalorder %s25, 0
      %p175 = por %p173, %p174
      %p176 = scmp.ne.s32.totalorder %s162, %s163
      %p177 = scmp.eq.s32.totalorder %s26, 1
      %p178 = por %p176, %p177
      %p180 = scmp.ne.s32.totalorder %s163, %s179
      %p181 = scmp.eq.s32.totalorder %s26, 0
      %p182 = por %p180, %p181
      %s183 = ssub.s32 %s27, %s46
      %s184 = ssub.s32 %s28, %s42
      %s185 = sor.u32 %s183, %s184
      %s186 = ssub.s32 %s29, %s38
      %s187 = sor.u32 %s185, %s186
      %p188 = scmp.eq.s32.totalorder %s187, 0
      %s190 = sadd.s32 %s189, 1
      %s191 = scalar_select %p188, %s189, %s190
      %p194 = pneg %p188
      %p195 = scmp.eq.s32.totalorder %s20, 1
      %p196 = por %p194, %p195
      %p197 = scmp.ne.s32.totalorder %s189, %s192
      %p198 = scmp.eq.s32.totalorder %s20, 0
      %p199 = por %p197, %p198
      %p200 = scmp.ne.s32.totalorder %s189, %s192
      %p201 = scmp.eq.s32.totalorder %s25, 1
      %p202 = por %p200, %p201
      %p203 = scmp.ne.s32.totalorder %s192, %s193
      %p204 = scmp.eq.s32.totalorder %s25, 0
      %p205 = por %p203, %p204
      %p206 = scmp.ne.s32.totalorder %s192, %s193
      %p207 = scmp.eq.s32.totalorder %s26, 1
      %p208 = por %p206, %p207
      %p210 = scmp.ne.s32.totalorder %s193, %s209
      %p211 = scmp.eq.s32.totalorder %s26, 0
      %p212 = por %p210, %p211
      %p213 = scmp.le.s32.totalorder 1, %s20
      %p214 = scmp.lt.s32.totalorder %s20, 3
      %p215 = pnand %p213, %p214
      %p216 = pneg %p215
      // Predicated region
      $region9: #{tpu_custom_call.1} parent=5 // pred_check
        _
      $region10: #{tpu_custom_call.1} parent=5 // pred_check_branch
        %218 = sbr.rel (%p215) target = $region12
      $region11: #{tpu_custom_call.1} parent=5 // pred_region
        %s219 = ssub.s32 %s20, 1
        // Predicated region
        $region13: #{tpu_custom_call.1} parent=11 // pred_check
          %p220 = pneg %p123
        $region14: #{tpu_custom_call.1} parent=11 // pred_check_branch
          %222 = sbr.rel (%p220) target = $region16
        $region15: #{tpu_custom_call.1} parent=11 // pred_region
          %p223 = scmp.lt.s32.totalorder %s31, 0
          %s224 = scalar_select %p223, %s31, 0
          %s225 = smul.addr %s224, 8
          %s226 = scalar_lea.vmem %s2, %s225
        $region16: #{tpu_custom_call.1} parent=11 // pred_fallthru
          _
        // Predicated region
        $region17: #{tpu_custom_call.1} parent=11 // pred_check
          %p227 = pneg %p149
        $region18: #{tpu_custom_call.1} parent=11 // pred_check_branch
          %229 = sbr.rel (%p227) target = $region20
        $region19: #{tpu_custom_call.1} parent=11 // pred_region
          %p230 = scmp.lt.s32.totalorder %s31, 0
          %s231 = scalar_select %p230, %s31, 0
          %s232 = smul.addr %s231, 8
          %s233 = scalar_lea.vmem %s3, %s232
        $region20: #{tpu_custom_call.1} parent=11 // pred_fallthru
          _
        // Predicated region
        $region21: #{tpu_custom_call.1} parent=11 // pred_check
          %p234 = pneg %p175
        $region22: #{tpu_custom_call.1} parent=11 // pred_check_branch
          %236 = sbr.rel (%p234) target = $region24
        $region23: #{tpu_custom_call.1} parent=11 // pred_region
          %p237 = scmp.lt.s32.totalorder %s31, 0
          %s238 = scalar_select %p237, %s31, 0
          %s239 = smul.addr %s238, 8
          %s240 = scalar_lea.vmem %s4, %s239
        $region24: #{tpu_custom_call.1} parent=11 // pred_fallthru
          _
      $region12: #{tpu_custom_call.1} parent=5 // pred_fallthru
        _
      %p241 = scmp.lt.s32.totalorder %s20, 2
      // Predicated region
      $region25: #{tpu_custom_call.1} parent=5 // pred_check
        %p242 = pneg %p241
      $region26: #{tpu_custom_call.1} parent=5 // pred_check_branch
        %244 = sbr.rel (%p242) target = $region28
      $region27: #{tpu_custom_call.1} parent=5 // pred_region
        // Predicated region
        $region29: #{tpu_custom_call.1} parent=27 // pred_check
          %p245 = pneg %p61
        $region30: #{tpu_custom_call.1} parent=27 // pred_check_branch
          %247 = sbr.rel (%p245) target = $region32
        $region31: #{tpu_custom_call.1} parent=27 // pred_region
          %s248 = sand.u32 %s51, 1
          %s249 = scalar_lea.sflag [#allocation3], %s248
          %s250 = sand.u32 %s51, 1
          %s251 = smul.addr %s250, 8
          %s252 = scalar_lea.vmem [#allocation2], %s251
          %s254 = ssub.s32 128, 128
          %255 = vsyncadd %s249, %s254
          %s256 = smul.addr %s27, 2
          %s257 = sadd.s32 %s29, %s256
          %s258 = smul.addr %s257, 128
          %s259 = scalar_lea.hbm %s0, %s258
          %s261 = sshll.u32 %s252, 4
          %s262 = int_to_ptr.vmem [resolvable:$true] %s261
          %264 = dma.hbm_to_vmem [thread:$0]  %s259, 128, %s262, %s249
        $region32: #{tpu_custom_call.1} parent=27 // pred_fallthru
          _
        // Predicated region
        $region33: #{tpu_custom_call.1} parent=27 // pred_check
          %p265 = pneg %p91
        $region34: #{tpu_custom_call.1} parent=27 // pred_check_branch
          %267 = sbr.rel (%p265) target = $region36
        $region35: #{tpu_custom_call.1} parent=27 // pred_region
          %s268 = sand.u32 %s81, 1
          %s269 = scalar_lea.sflag [#allocation6], %s268
          %s270 = sand.u32 %s81, 1
          %s271 = smul.addr %s270, 8
          %s272 = scalar_lea.vmem [#allocation5], %s271
          %s273 = sadd.s32 %s29, 1
          %s275 = ssub.s32 128, 128
          %276 = vsyncadd %s269, %s275
          %s277 = smul.addr %s27, 2
          %s278 = sadd.s32 %s273, %s277
          %s279 = smul.addr %s278, 128
          %s280 = scalar_lea.hbm %s1, %s279
          %s282 = sshll.u32 %s272, 4
          %s283 = int_to_ptr.vmem [resolvable:$true] %s282
          %285 = dma.hbm_to_vmem [thread:$0]  %s280, 128, %s283, %s269
        $region36: #{tpu_custom_call.1} parent=27 // pred_fallthru
          _
      $region28: #{tpu_custom_call.1} parent=5 // pred_fallthru
        _
      %p286 = scmp.le.s32.totalorder 1, %s20
      %p287 = scmp.lt.s32.totalorder %s20, 3
      %p288 = pnand %p286, %p287
      %p289 = pneg %p288
      // Predicated region
      $region37: #{tpu_custom_call.1} parent=5 // pred_check
        _
      $region38: #{tpu_custom_call.1} parent=5 // pred_check_branch
        %291 = sbr.rel (%p288) target = $region40
      $region39: #{tpu_custom_call.1} parent=5 // pred_region
        %s292 = ssub.s32 %s20, 1
        %s293 = sand.u32 %s54, 1
        %s294 = scalar_lea.sflag [#allocation3], %s293
        %s295 = sand.u32 %s54, 1
        %s296 = smul.addr %s295, 8
        %s297 = scalar_lea.vmem [#allocation2], %s296
        // Predicated region
        $region41: #{tpu_custom_call.1} parent=39 // pred_check
          %p298 = pneg %p67
        $region42: #{tpu_custom_call.1} parent=39 // pred_check_branch
          %300 = sbr.rel (%p298) target = $region44
        $region43: #{tpu_custom_call.1} parent=39 // pred_region
          %301 = dma.done %s294, 128
        $region44: #{tpu_custom_call.1} parent=39 // pred_fallthru
          _
        %s302 = sand.u32 %s84, 1
        %s303 = scalar_lea.sflag [#allocation6], %s302
        %s304 = sand.u32 %s84, 1
        %s305 = smul.addr %s304, 8
        %s306 = scalar_lea.vmem [#allocation5], %s305
        // Predicated region
        $region45: #{tpu_custom_call.1} parent=39 // pred_check
          %p307 = pneg %p97
        $region46: #{tpu_custom_call.1} parent=39 // pred_check_branch
          %309 = sbr.rel (%p307) target = $region48
        $region47: #{tpu_custom_call.1} parent=39 // pred_region
          %310 = dma.done %s303, 128
        $region48: #{tpu_custom_call.1} parent=39 // pred_fallthru
          _
        %s311 = sand.u32 %s54, 1
        %s312 = scalar_lea.sflag [#allocation3], %s311
        %s313 = sand.u32 %s54, 1
        %s314 = smul.addr %s313, 8
        %s315 = scalar_lea.vmem [#allocation2], %s314
        %p316 = pneg %p67
        %p317 = pneg %p64
        %s318 = sand.u32 %s84, 1
        %s319 = scalar_lea.sflag [#allocation6], %s318
        %s320 = sand.u32 %s84, 1
        %s321 = smul.addr %s320, 8
        %s322 = scalar_lea.vmem [#allocation5], %s321
        %p323 = pneg %p97
        %p324 = pneg %p94
        %p325 = scmp.lt.s32.totalorder %s31, 0
        %s326 = scalar_select %p325, %s31, 0
        %s327 = smul.addr %s326, 8
        %s328 = scalar_lea.vmem %s2, %s327
        %p329 = pneg %p123
        %p330 = pneg %p120
        %p331 = scmp.lt.s32.totalorder %s31, 0
        %s332 = scalar_select %p331, %s31, 0
        %s333 = smul.addr %s332, 8
        %s334 = scalar_lea.vmem %s3, %s333
        %p335 = pneg %p149
        %p336 = pneg %p146
        %p337 = scmp.lt.s32.totalorder %s31, 0
        %s338 = scalar_select %p337, %s31, 0
        %s339 = smul.addr %s338, 8
        %s340 = scalar_lea.vmem %s4, %s339
        %p341 = pneg %p175
        %p342 = pneg %p172
        %p343 = pneg %p205
        %p344 = pneg %p202
        %s345 = sand.u32 %s192, 1
        %s346 = scalar_lea.sflag [#allocation4], %s345
        %s347 = sand.u32 %s192, 1
        %s348 = smul.addr %s347, 8
        %s349 = scalar_lea.vmem [#allocation7], %s348
        %s350 = sadd.s32 %s32, 1
        %p351 = scmp.lt.s32.totalorder %s31, 0
        %s352 = scalar_select %p351, %s31, 0
        %s353 = smul.addr %s352, 8
        %s354 = scalar_lea.vmem %s2, %s353
        %p355 = scmp.lt.s32.totalorder %s31, 0
        %s356 = scalar_select %p355, %s31, 0
        %s357 = smul.addr %s356, 8
        %s358 = scalar_lea.vmem %s3, %s357
        %p359 = scmp.lt.s32.totalorder %s31, 0
        %s360 = scalar_select %p359, %s31, 0
        %s361 = smul.addr %s360, 8
        %s362 = scalar_lea.vmem %s4, %s361
        %v363 = vld [vmem:[%s297] sm:$0xff]
        %v364 = vld [vmem:[%s306] sm:$0xff]
        %367 = vrot.lane.b32.xlu0 %v363, 127
        %v368 = vpop.permute.xlu0 %367
        %369 = vrot.lane.b32.xlu0 %v364, 127
        %v370 = vpop.permute.xlu0 %369
        %vm371 = vcmask 1039360
        %v372 = vsel %vm371, %v368, %v370
        %374 = vrot.lane.b32.xlu0 %v363, 126
        %v375 = vpop.permute.xlu0 %374
        %376 = vrot.lane.b32.xlu0 %v364, 126
        %v377 = vpop.permute.xlu0 %376
        %vm378 = vcmask 1031168
        %v379 = vsel %vm378, %v375, %v377
        %v381 = vld [vmem:[%s354] sm:$0xff]
        %vm382 = vcmask 195584
        %v384 = vsel %vm382, %v381, 0
        %386 = vmatprep.subr.mxu0 0.0
        %387 = vmatpush1.msra.mxu0 0.0
        %388 = vmatprep.subr.mxu0 0.0
        %389 = vmatpush1.msra.mxu0 0.0
        %390 = vmatprep.subr.mxu0 0.0
        %391 = vmatpush1.msra.mxu0 0.0
        %392 = vmatprep.subr.mxu0 0.0
        %393 = vmatpush1.msra.mxu0 0.0
        %394 = vmatprep.subr.mxu0 0.0
        %395 = vmatpush1.msra.mxu0 0.0
        %396 = vmatprep.subr.mxu0 0.0
        %397 = vmatpush1.msra.mxu0 0.0
        %398 = vmatprep.subr.mxu0 0.0
        %399 = vmatpush1.msra.mxu0 0.0
        %400 = vmatprep.subr.mxu0 0.0
        %401 = vmatpush1.msra.mxu0 0.0
        %402 = vmatprep.subr.mxu0 0.0
        %403 = vmatpush1.msra.mxu0 0.0
        %404 = vmatprep.subr.mxu0 0.0
        %405 = vmatpush1.msra.mxu0 0.0
        %406 = vmatprep.subr.mxu0 0.0
        %407 = vmatpush1.msra.mxu0 0.0
        %408 = vmatprep.subr.mxu0 0.0
        %409 = vmatpush1.msra.mxu0 0.0
        %410 = vmatprep.subr.mxu0 0.0
        %411 = vmatpush1.msra.mxu0 0.0
        %412 = vmatprep.subr.mxu0 0.0
        %413 = vmatpush1.msra.mxu0 %v379
        %414 = vmatprep.subr.mxu0 0.0
        %415 = vmatpush1.msra.mxu0 %v372
        %416 = vmatprep.subr.mxu0 0.0
        %417 = vmatpush1.msra.mxu0 %v363
        %418 = vmatprep.subr.mxu0 0.0
        %419 = vmatpush2.msra.mxu0 0.0
        %420 = vmatprep.subr.mxu0 0.0
        %421 = vmatpush2.msra.mxu0 0.0
        %422 = vmatprep.subr.mxu0 0.0
        %423 = vmatpush2.msra.mxu0 0.0
        %424 = vmatprep.subr.mxu0 0.0
        %425 = vmatpush2.msra.mxu0 0.0
        %426 = vmatprep.subr.mxu0 0.0
        %427 = vmatpush2.msra.mxu0 0.0
        %428 = vmatprep.subr.mxu0 0.0
        %429 = vmatpush2.msra.mxu0 0.0
        %430 = vmatprep.subr.mxu0 0.0
        %431 = vmatpush2.msra.mxu0 0.0
        %432 = vmatprep.subr.mxu0 0.0
        %433 = vmatpush2.msra.mxu0 0.0
        %434 = vmatprep.subr.mxu0 0.0
        %435 = vmatpush2.msra.mxu0 0.0
        %436 = vmatprep.subr.mxu0 0.0
        %437 = vmatpush2.msra.mxu0 0.0
        %438 = vmatprep.subr.mxu0 0.0
        %439 = vmatpush2.msra.mxu0 0.0
        %440 = vmatprep.subr.mxu0 0.0
        %441 = vmatpush2.msra.mxu0 0.0
        %442 = vmatprep.subr.mxu0 0.0
        %443 = vmatpush2.msra.mxu0 0.0
        %444 = vmatprep.subr.mxu0 0.0
        %445 = vmatpush2.msra.mxu0 0.0
        %446 = vmatprep.subr.mxu0 0.0
        %447 = vmatpush2.msra.mxu0 0.0
        %448 = vmatprep.subr.mxu0 0.0
        %449 = vmatpush2.msra.mxu0 0.0
        %450 = vmatprep.mubr.f32.mxu0 0.0
        %451 = vmatmul.mubr.f32.gmra.mxu0 %v384
        %v452 = vpop.f32.mrf.mxu0
        %v453 = vadd.f32 0.0, %v452
        %v454 = vpop.f32.mrf.mxu0
        %455 = vdwg.mxu0
        %v456 = vld [vmem:[%s358] sm:$0xff]
        %458 = vset.pattern.permute.xlu0 0
        %459 = vperm.xlu0 %458, %v456
        %v460 = vpop.permute.xlu0 %459
        %v462 = vmul.f32 %v453, %v460
        %v463 = vld [vmem:[%s362] sm:$0xff]
        %465 = vset.pattern.permute.xlu0 0
        %466 = vperm.xlu0 %465, %v463
        %v467 = vpop.permute.xlu0 %466
        %v469 = vadd.f32 %v462, %v467
        %vm470 = vcmp.gt.f32.partialorder %v469, 0.0
        %v471 = vmul.f32 %v469, 0.01
        %v472 = vsel %vm470, %v469, %v471
        %473 = vst [vmem:[%s349] sm:$0xff] %v472
        %s474 = sand.u32 %s192, 1
        %s475 = scalar_lea.sflag [#allocation4], %s474
        %s476 = sand.u32 %s192, 1
        %s477 = smul.addr %s476, 8
        %s478 = scalar_lea.vmem [#allocation7], %s477
        // Predicated region
        $region49: #{tpu_custom_call.1} parent=39 // pred_check
          %p479 = pneg %p202
        $region50: #{tpu_custom_call.1} parent=39 // pred_check_branch
          %481 = sbr.rel (%p479) target = $region52
        $region51: #{tpu_custom_call.1} parent=39 // pred_region
          %s483 = ssub.s32 128, 128
          %484 = vsyncadd %s475, %s483
          %s485 = sadd.s32 %s32, %s31
          %s486 = sadd.s32 %s485, %s30
          %s487 = smul.addr %s486, 128
          %s488 = scalar_lea.hbm %s5, %s487
          %s490 = sshll.u32 %s478, 4
          %s491 = int_to_ptr.vmem [resolvable:$true] %s490
          %493 = dma.vmem_to_hbm [thread:$0]  %s491, 128, %s488, %s475
        $region52: #{tpu_custom_call.1} parent=39 // pred_fallthru
          _
      $region40: #{tpu_custom_call.1} parent=5 // pred_fallthru
        _
      %p494 = scmp.le.s32.totalorder 2, %s20
      // Predicated region
      $region53: #{tpu_custom_call.1} parent=5 // pred_check
        %p495 = pneg %p494
      $region54: #{tpu_custom_call.1} parent=5 // pred_check_branch
        %497 = sbr.rel (%p495) target = $region56
      $region55: #{tpu_custom_call.1} parent=5 // pred_region
        %s498 = ssub.s32 %s20, 2
        // Predicated region
        $region57: #{tpu_custom_call.1} parent=55 // pred_check
          %p499 = pneg %p208
        $region58: #{tpu_custom_call.1} parent=55 // pred_check_branch
          %501 = sbr.rel (%p499) target = $region60
        $region59: #{tpu_custom_call.1} parent=55 // pred_region
          %s502 = sand.u32 %s193, 1
          %s503 = scalar_lea.sflag [#allocation4], %s502
          %s504 = sand.u32 %s193, 1
          %s505 = smul.addr %s504, 8
          %s506 = scalar_lea.vmem [#allocation7], %s505
          %507 = dma.done %s503, 128
        $region60: #{tpu_custom_call.1} parent=55 // pred_fallthru
          _
      $region56: #{tpu_custom_call.1} parent=5 // pred_fallthru
        _
    $region6: #{tpu_custom_call.1} parent=1 // loop_footer
      %s24 = sadd.s32 1, %s20
    $region7: #{tpu_custom_call.1} parent=1 // loop_footer_branch
      %19 = sbr.rel target = $region3
    $region8: #{tpu_custom_call.1} parent=1 // loop_exit
      _
    %508 = vsyncpa [#allocation3], 1
    %s509 = scalar_lea.sflag [#allocation3], 1
    %510 = vsyncpa %s509, 1
    %511 = vsyncpa [#allocation6], 1
    %s512 = scalar_lea.sflag [#allocation6], 1
    %513 = vsyncpa %s512, 1
    %514 = vsyncpa [#allocation4], 1
    %s515 = scalar_lea.sflag [#allocation4], 1
    %516 = vsyncpa %s515, 1

</llo_original>
